<compile_context>
chip_gen: v5e
topology: v5e:2x2
jax: 0.10.0
libtpu: 0.0.40
codegen_flags: <defaults>
</compile_context>

<pallas_src>
import functools

import jax
import jax.numpy as jnp
from jax.experimental import pallas as pl
from jax.experimental.pallas import tpu as pltpu


def dynamic_gating_kernel(x_ref, w1t_ref, b1_ref, w2t_ref, b2_ref, o_ref, *, C):
    xb = x_ref[...]                                   # (Bt, C, HW), input dtype
    x32 = xb.astype(jnp.float32)

    # Spatial mean (f32 accumulation) -> (Bt, C)
    m = jnp.mean(x32, axis=2)

    # Linear1 + ReLU, lane-dense: (Bt, C) @ (C, hidden) -> (Bt, hidden)
    h = jnp.dot(m, w1t_ref[...], preferred_element_type=jnp.float32) + b1_ref[...]
    h = jnp.maximum(h, 0.0)

    # Fused Linear2: (Bt, hidden) @ (hidden, 2C) -> (Bt, 2C)
    p = jnp.dot(h, w2t_ref[...], preferred_element_type=jnp.float32) + b2_ref[...]
    gw = p[:, :C]                                     # (Bt, C)  gate weights
    gb = p[:, C:]                                     # (Bt, C)  gate biases

    # Channel contraction -> (Bt, HW).  For large C an MXU contraction beats
    # the VALU multiply + cross-sublane (XLU) reduce.
    if C >= 128:
        s = jnp.einsum('bc,bcs->bs', gw, x32,
                       preferred_element_type=jnp.float32)
    else:
        s = jnp.sum(x32 * gw[:, :, None], axis=1)

    # gate: sigmoid(s broadcast over channels + gb broadcast over spatial)
    gate = jax.nn.sigmoid(s[:, None, :] + gb[:, :, None])   # (Bt, C, HW)
    o_ref[...] = (x32 * gate).astype(o_ref.dtype)


def _choose_bt(B, C, HW, itemsize, *, max_block_bytes=4 << 20, min_steps=2):
    """Pick how many batch elements to pack per grid step."""
    per_b = max(1, C * HW * itemsize)
    bt = max(1, min(B, max_block_bytes // per_b))
    # Keep at least `min_steps` grid steps when the batch allows it, so the
    # ("parallel",) grid axis can shard across dual-TensorCore chips (v7x).
    while bt > 1 and (B + bt - 1) // bt < min(min_steps, B):
        bt -= 1
    # Require Bt | B so every block is full (no partial-block masking needed).
    while bt > 1 and B % bt != 0:
        bt -= 1
    return bt


def dynamic_gating_pallas(x_nchw, w1, b1, w2, b2):
    """x_nchw: (B, C, H, W). Parameters follow nn.Linear conventions:
       w1: (hidden, C), b1: (hidden,), w2: (2C, hidden), b2: (2C,)."""
    x_nchw = jnp.asarray(x_nchw)
    B, C, H, W = x_nchw.shape
    hidden = w1.shape[0]
    HW = H * W
    # TODO(synk): for very large H*W, add spatial tiling (with mean / sum
    # carried across tiles) instead of keeping the whole H*W row per block.

    x = x_nchw.reshape(B, C, HW)                      # keep input dtype (bf16-friendly)

    # Lane-dense weight prep: transpose so hidden / 2C live on the lane axis,
    # and fuse the two Linear2 halves into a single matmul.
    w1t = jnp.asarray(w1, jnp.float32).T              # (C, hidden)
    b1r = jnp.asarray(b1, jnp.float32).reshape(1, hidden)
    w2t = jnp.asarray(w2, jnp.float32).T              # (hidden, 2C)
    b2r = jnp.asarray(b2, jnp.float32).reshape(1, 2 * C)

    itemsize = jnp.dtype(x.dtype).itemsize
    Bt = _choose_bt(B, C, HW, itemsize)
    block_bytes = Bt * C * HW * itemsize
    weight_bytes = (C * hidden + hidden + hidden * 2 * C + 2 * C) * 4
    # in + out blocks, double-buffered, + weights + slack; capped for v7x (64 MiB).
    vmem_limit = int(min(max(4 * block_bytes + 2 * weight_bytes + (2 << 20),
                             16 << 20), 48 << 20))

    kernel = functools.partial(dynamic_gating_kernel, C=C)

    out = pl.pallas_call(
        kernel,
        out_shape=jax.ShapeDtypeStruct((B, C, HW), x.dtype),
        grid_spec=pltpu.PrefetchScalarGridSpec(
            num_scalar_prefetch=0,
            grid=(B // Bt,),
            in_specs=[
                pl.BlockSpec((Bt, C, HW), lambda b: (b, 0, 0)),      # x block
                pl.BlockSpec((C, hidden), lambda b: (0, 0)),         # W1^T
                pl.BlockSpec((1, hidden), lambda b: (0, 0)),         # b1 (row)
                pl.BlockSpec((hidden, 2 * C), lambda b: (0, 0)),     # W2^T (fused)
                pl.BlockSpec((1, 2 * C), lambda b: (0, 0)),          # b2 (row, fused)
            ],
            out_specs=pl.BlockSpec((Bt, C, HW), lambda b: (b, 0, 0)),
        ),
        compiler_params=pltpu.CompilerParams(
            dimension_semantics=("parallel",),
            vmem_limit_bytes=vmem_limit,
        ),
    )(x, w1t, b1r, w2t, b2r)

    return out.reshape(B, C, H, W)


def dynamic_gating_reference(x, w1, b1, w2, b2):
    """Pure-JAX replica of the PyTorch forward, for verification."""
    B, C, H, W = x.shape
    xf = x.astype(jnp.float32)
    m = xf.mean(axis=(2, 3))                                   # (B, C)
    h = jax.nn.relu(m @ w1.T + b1)                             # (B, hidden)
    p = h @ w2.T + b2                                          # (B, 2C)
    weight = p[:, :C][:, :, None, None]                        # (B, C, 1, 1)
    bias = p[:, C:][:, :, None, None]                          # (B, C, 1, 1)
    gate = jax.nn.sigmoid(jnp.sum(xf * weight, axis=1, keepdims=True) + bias)
    return (xf * gate).astype(x.dtype)


if __name__ == "__main__":
    # Shapes consistent with the module: feature_dim = C = 4, hidden = 32.
    C, hidden = 4, 32

    key = jax.random.PRNGKey(0)
    kx, k1, k2, k3, k4, kx2 = jax.random.split(key, 6)

    w1 = 0.1 * jax.random.normal(k1, (hidden, C), dtype=jnp.float32)
    b1 = 0.1 * jax.random.normal(k2, (hidden,), dtype=jnp.float32)
    w2 = 0.1 * jax.random.normal(k3, (2 * C, hidden), dtype=jnp.float32)
    b2 = 0.1 * jax.random.normal(k4, (2 * C,), dtype=jnp.float32)

    # Primary case: B=2, H=W=16 (grid of 2 steps, Bt=1).
    B, H, W = 2, 16, 16
    x = jax.random.normal(kx, (B, C, H, W), dtype=jnp.float32)
    out = jax.block_until_ready(dynamic_gating_pallas(x, w1, b1, w2, b2))
    ref = dynamic_gating_reference(x, w1, b1, w2, b2)
    assert out.shape == (B, C, H, W)
    assert jnp.allclose(out, ref, atol=1e-5, rtol=1e-5), "mismatch vs reference (B=2)"

    # Second case exercises the batched (Bt > 1) path: B=8 -> Bt=4, grid=(2,).
    B2 = 8
    x2 = jax.random.normal(kx2, (B2, C, H, W), dtype=jnp.float32)
    out2 = jax.block_until_ready(dynamic_gating_pallas(x2, w1, b1, w2, b2))
    ref2 = dynamic_gating_reference(x2, w1, b1, w2, b2)
    assert jnp.allclose(out2, ref2, atol=1e-5, rtol=1e-5), "mismatch vs reference (B=8)"

    print("KERNEL_OK")
</pallas_src>

<mosaic_0001>
module attributes {stable_mosaic.version = 11 : i64} {
  func.func @dynamic_gating_kernel(%arg0: i32, %arg1: memref<1x4x256xf32, #tpu.memory_space<vmem>>, %arg2: memref<4x32xf32, #tpu.memory_space<vmem>>, %arg3: memref<1x32xf32, #tpu.memory_space<vmem>>, %arg4: memref<32x8xf32, #tpu.memory_space<vmem>>, %arg5: memref<1x8xf32, #tpu.memory_space<vmem>>, %arg6: memref<1x4x256xf32, #tpu.memory_space<vmem>>) attributes {dimension_semantics = [#tpu.dimension_semantics<parallel>], iteration_bounds = array<i64: 2>, scalar_prefetch = 0 : i64, scratch_operands = 0 : i64, tpu.core_type = #tpu.core_type<tc>, window_params = [{transform_indices = @transform_0, window_bounds = array<i64: 1, 4, 256>}, {pipeline_mode = #tpu.pipeline_mode<synchronous>, transform_indices = @transform_1, window_bounds = array<i64: 4, 32>}, {pipeline_mode = #tpu.pipeline_mode<synchronous>, transform_indices = @transform_2, window_bounds = array<i64: 1, 32>}, {pipeline_mode = #tpu.pipeline_mode<synchronous>, transform_indices = @transform_3, window_bounds = array<i64: 32, 8>}, {pipeline_mode = #tpu.pipeline_mode<synchronous>, transform_indices = @transform_4, window_bounds = array<i64: 1, 8>}, {transform_indices = @transform_5, window_bounds = array<i64: 1, 4, 256>}]} {
    %c0 = arith.constant 0 : index
    %c0_0 = arith.constant 0 : index
    %c0_1 = arith.constant 0 : index
    %0 = vector.load %arg1[%c0, %c0_0, %c0_1] : memref<1x4x256xf32, #tpu.memory_space<vmem>>, vector<1x4x256xf32>
    %cst = arith.constant dense<0.000000e+00> : vector<1x4xf32>
    %1 = vector.multi_reduction <add>, %0, %cst [2] : vector<1x4x256xf32> to vector<1x4xf32>
    %cst_2 = arith.constant 2.560000e+02 : f32
    %2 = vector.broadcast %cst_2 : f32 to vector<1x4xf32>
    %3 = arith.divf %1, %2 : vector<1x4xf32>
    %c0_3 = arith.constant 0 : index
    %c0_4 = arith.constant 0 : index
    %4 = vector.load %arg2[%c0_3, %c0_4] : memref<4x32xf32, #tpu.memory_space<vmem>>, vector<4x32xf32>
    %cst_5 = arith.constant dense<0.000000e+00> : vector<1x32xf32>
    %5 = tpu.matmul %3, %4, %cst_5 {dimension_numbers = #tpu.dot_dimension_numbers<[1], [0], [0], [1], [0, 0, 1, 1], [], []>} : vector<1x4xf32>, vector<4x32xf32>, vector<1x32xf32> -> vector<1x32xf32>
    %c0_6 = arith.constant 0 : index
    %c0_7 = arith.constant 0 : index
    %6 = vector.load %arg3[%c0_6, %c0_7] : memref<1x32xf32, #tpu.memory_space<vmem>>, vector<1x32xf32>
    %7 = arith.addf %5, %6 : vector<1x32xf32>
    %cst_8 = arith.constant 0.000000e+00 : f32
    %8 = vector.broadcast %cst_8 : f32 to vector<1x32xf32>
    %9 = arith.maximumf %7, %8 : vector<1x32xf32>
    %c0_9 = arith.constant 0 : index
    %c0_10 = arith.constant 0 : index
    %10 = vector.load %arg4[%c0_9, %c0_10] : memref<32x8xf32, #tpu.memory_space<vmem>>, vector<32x8xf32>
    %cst_11 = arith.constant dense<0.000000e+00> : vector<1x8xf32>
    %11 = tpu.matmul %9, %10, %cst_11 {dimension_numbers = #tpu.dot_dimension_numbers<[1], [0], [0], [1], [0, 0, 1, 1], [], []>} : vector<1x32xf32>, vector<32x8xf32>, vector<1x8xf32> -> vector<1x8xf32>
    %c0_12 = arith.constant 0 : index
    %c0_13 = arith.constant 0 : index
    %12 = vector.load %arg5[%c0_12, %c0_13] : memref<1x8xf32, #tpu.memory_space<vmem>>, vector<1x8xf32>
    %13 = arith.addf %11, %12 : vector<1x8xf32>
    %14 = vector.extract_strided_slice %13 {offsets = [0, 0], sizes = [1, 4], strides = [1, 1]} : vector<1x8xf32> to vector<1x4xf32>
    %15 = vector.extract_strided_slice %13 {offsets = [0, 4], sizes = [1, 4], strides = [1, 1]} : vector<1x8xf32> to vector<1x4xf32>
    %16 = vector.shape_cast %14 : vector<1x4xf32> to vector<1x4x1xf32>
    %17 = vector.broadcast %16 : vector<1x4x1xf32> to vector<1x4x256xf32>
    %18 = arith.mulf %0, %17 : vector<1x4x256xf32>
    %cst_14 = arith.constant dense<0.000000e+00> : vector<1x256xf32>
    %19 = vector.multi_reduction <add>, %18, %cst_14 [1] : vector<1x4x256xf32> to vector<1x256xf32>
    %20 = vector.shape_cast %19 : vector<1x256xf32> to vector<1x1x256xf32>
    %21 = vector.shape_cast %15 : vector<1x4xf32> to vector<1x4x1xf32>
    %22 = vector.broadcast %20 : vector<1x1x256xf32> to vector<1x4x256xf32>
    %23 = vector.broadcast %21 : vector<1x4x1xf32> to vector<1x4x256xf32>
    %24 = arith.addf %22, %23 : vector<1x4x256xf32>
    %25 = arith.negf %24 : vector<1x4x256xf32>
    %26 = math.exp %25 : vector<1x4x256xf32>
    %cst_15 = arith.constant 1.000000e+00 : f32
    %27 = vector.broadcast %cst_15 : f32 to vector<1x4x256xf32>
    %28 = arith.addf %27, %26 : vector<1x4x256xf32>
    %29 = arith.divf %27, %28 : vector<1x4x256xf32>
    %30 = arith.mulf %0, %29 : vector<1x4x256xf32>
    %c0_16 = arith.constant 0 : index
    %c0_17 = arith.constant 0 : index
    %c0_18 = arith.constant 0 : index
    %31 = vector.load %arg6[%c0_16, %c0_17, %c0_18] : memref<1x4x256xf32, #tpu.memory_space<vmem>>, vector<1x4x256xf32>
    tpu.vector_store %arg6[%c0_16, %c0_17, %c0_18], %30 {strides = array<i32>} : memref<1x4x256xf32, #tpu.memory_space<vmem>>, vector<1x4x256xf32>,
    return
  }
  func.func @transform_0(%arg0: i32) -> (i32, i32, i32) {
    %c0_i32 = arith.constant 0 : i32
    %c0_i32_0 = arith.constant 0 : i32
    %c0_i32_1 = arith.constant 0 : i32
    return %arg0, %c0_i32, %c0_i32_0 : i32, i32, i32
  }
  func.func @transform_1(%arg0: i32) -> (i32, i32) {
    %c0_i32 = arith.constant 0 : i32
    %c0_i32_0 = arith.constant 0 : i32
    %c0_i32_1 = arith.constant 0 : i32
    return %c0_i32, %c0_i32_0 : i32, i32
  }
  func.func @transform_2(%arg0: i32) -> (i32, i32) {
    %c0_i32 = arith.constant 0 : i32
    %c0_i32_0 = arith.constant 0 : i32
    %c0_i32_1 = arith.constant 0 : i32
    return %c0_i32, %c0_i32_0 : i32, i32
  }
  func.func @transform_3(%arg0: i32) -> (i32, i32) {
    %c0_i32 = arith.constant 0 : i32
    %c0_i32_0 = arith.constant 0 : i32
    %c0_i32_1 = arith.constant 0 : i32
    return %c0_i32, %c0_i32_0 : i32, i32
  }
  func.func @transform_4(%arg0: i32) -> (i32, i32) {
    %c0_i32 = arith.constant 0 : i32
    %c0_i32_0 = arith.constant 0 : i32
    %c0_i32_1 = arith.constant 0 : i32
    return %c0_i32, %c0_i32_0 : i32, i32
  }
  func.func @transform_5(%arg0: i32) -> (i32, i32, i32) {
    %c0_i32 = arith.constant 0 : i32
    %c0_i32_0 = arith.constant 0 : i32
    %c0_i32_1 = arith.constant 0 : i32
    return %arg0, %c0_i32, %c0_i32_0 : i32, i32, i32
  }
}

</mosaic_0001>

<llo_original>
// kernel: tpu_custom_call.1
$region0: #{tpu_custom_call.1}
  #allocation0 [shape = 'u32[]', space=smem, size = 0x4, offset = 0x4, fixed_abs, tag = 'smem constant byte address 0x4 - core index']
  #allocation1 [shape = 'u32[72,128]{1,0:T(1,128)}', space=vmem, size = 0x9000, scoped, tag = 'internal scratch']
  %s0 = inlined_call_operand.vmem [shape: f32[2,4,256], index: 0, kind: input, shape index: {}]
  %s1 = inlined_call_operand.vmem [shape: f32[4,32], index: 1, kind: input, shape index: {}]
  %s2 = inlined_call_operand.vmem [shape: f32[1,32], index: 2, kind: input, shape index: {}]
  %s3 = inlined_call_operand.vmem [shape: f32[32,8], index: 3, kind: input, shape index: {}]
  %s4 = inlined_call_operand.vmem [shape: f32[1,8], index: 4, kind: input, shape index: {}]
  %s5 = inlined_call_operand.hbm [shape: f32[2,4,256], index: 5, kind: output, shape index: {}]
  %s6 = sld [smem:[#allocation0]]
  $region53: #{tpu_custom_call.1} parent=0
    _
  %s8 = ssub.s32 1, %s6
  %s9 = scalar_select 0, %s8, %s6
  $region1: #{tpu_custom_call.1} parent=0
    #allocation2 [shape = 'u8[8192]{0}', space=vmem, size = 0x2000, scoped, tag = 'output window, operand 0']
    #allocation3 [shape = 's32[2]{0}', space=sflag, size = 0x8, scoped, tag = 'scoped memory for tpu_custom_call.1']
    %10 = vsyncpa [#allocation3], 0
    %s11 = scalar_lea.sflag [#allocation3], 1
    %12 = vsyncpa %s11, 0
    loop: start=0, step=1, limit=4
    $region2: #{tpu_custom_call.1} parent=1 // loop_pre_header
      _
    $region3: #{tpu_custom_call.1} parent=1 // loop_header
      %s14 = sphi 0, %s18
      %p15 = scmp.ge.s32.totalorder %s14, 4
      %s24 = sphi 0, %s26
      %s27 = sphi 0, %s24
      %s28 = sphi 0, %s27
      %s44 = sphi 0, %s28
      %s48 = sphi 0, %s48
      %s50 = sphi 0, %s48
      %s51 = sphi 0, %s50
      %s65 = sphi 0, %s51
      %s69 = sphi 0, %s69
      %s71 = sphi 0, %s69
      %s72 = sphi 0, %s71
      %s86 = sphi 0, %s72
      %s90 = sphi 0, %s90
      %s92 = sphi 0, %s90
      %s93 = sphi 0, %s92
      %s107 = sphi 0, %s93
      %s111 = sphi 0, %s111
      %s113 = sphi 0, %s111
      %s114 = sphi 0, %s113
      %s128 = sphi 0, %s114
      %s134 = sphi 0, %s136
      %s137 = sphi 0, %s134
      %s138 = sphi 0, %s137
      %s154 = sphi 0, %s138
    $region4: #{tpu_custom_call.1} parent=1 // loop_header_branch
      %17 = sbr.rel (%p15) target = $region8
    $region5: #{tpu_custom_call.1} parent=1 // loop_body
      %s19 = ssub.s32 %s14, 1
      %s20 = ssub.s32 %s14, 2
      %s21 = sadd.s32 %s14, 1
      %s22 = ssub.s32 %s14, %s21
      %p23 = scmp.eq.s32.totalorder %s22, 0
      %s25 = sadd.s32 %s24, 1
      %s26 = scalar_select %p23, %s24, %s25
      %p29 = pneg %p23
      %p30 = scmp.eq.s32.totalorder %s14, 1
      %p31 = por %p29, %p30
      %p32 = scmp.ne.s32.totalorder %s24, %s27
      %p33 = scmp.eq.s32.totalorder %s14, 0
      %p34 = por %p32, %p33
      %p35 = scmp.ne.s32.totalorder %s24, %s27
      %p36 = scmp.eq.s32.totalorder %s19, 1
      %p37 = por %p35, %p36
      %p38 = scmp.ne.s32.totalorder %s27, %s28
      %p39 = scmp.eq.s32.totalorder %s19, 0
      %p40 = por %p38, %p39
      %p41 = scmp.ne.s32.totalorder %s27, %s28
      %p42 = scmp.eq.s32.totalorder %s20, 1
      %p43 = por %p41, %p42
      %p45 = scmp.ne.s32.totalorder %s28, %s44
      %p46 = scmp.eq.s32.totalorder %s20, 0
      %p47 = por %p45, %p46
      %s49 = sadd.s32 %s48, 1
      %p52 = scmp.eq.s32.totalorder %s14, 1
      %p53 = scmp.ne.s32.totalorder %s48, %s50
      %p54 = scmp.eq.s32.totalorder %s14, 0
      %p55 = por %p53, %p54
      %p56 = scmp.ne.s32.totalorder %s48, %s50
      %p57 = scmp.eq.s32.totalorder %s19, 1
      %p58 = por %p56, %p57
      %p59 = scmp.ne.s32.totalorder %s50, %s51
      %p60 = scmp.eq.s32.totalorder %s19, 0
      %p61 = por %p59, %p60
      %p62 = scmp.ne.s32.totalorder %s50, %s51
      %p63 = scmp.eq.s32.totalorder %s20, 1
      %p64 = por %p62, %p63
      %p66 = scmp.ne.s32.totalorder %s51, %s65
      %p67 = scmp.eq.s32.totalorder %s20, 0
      %p68 = por %p66, %p67
      %s70 = sadd.s32 %s69, 1
      %p73 = scmp.eq.s32.totalorder %s14, 1
      %p74 = scmp.ne.s32.totalorder %s69, %s71
      %p75 = scmp.eq.s32.totalorder %s14, 0
      %p76 = por %p74, %p75
      %p77 = scmp.ne.s32.totalorder %s69, %s71
      %p78 = scmp.eq.s32.totalorder %s19, 1
      %p79 = por %p77, %p78
      %p80 = scmp.ne.s32.totalorder %s71, %s72
      %p81 = scmp.eq.s32.totalorder %s19, 0
      %p82 = por %p80, %p81
      %p83 = scmp.ne.s32.totalorder %s71, %s72
      %p84 = scmp.eq.s32.totalorder %s20, 1
      %p85 = por %p83, %p84
      %p87 = scmp.ne.s32.totalorder %s72, %s86
      %p88 = scmp.eq.s32.totalorder %s20, 0
      %p89 = por %p87, %p88
      %s91 = sadd.s32 %s90, 1
      %p94 = scmp.eq.s32.totalorder %s14, 1
      %p95 = scmp.ne.s32.totalorder %s90, %s92
      %p96 = scmp.eq.s32.totalorder %s14, 0
      %p97 = por %p95, %p96
      %p98 = scmp.ne.s32.totalorder %s90, %s92
      %p99 = scmp.eq.s32.totalorder %s19, 1
      %p100 = por %p98, %p99
      %p101 = scmp.ne.s32.totalorder %s92, %s93
      %p102 = scmp.eq.s32.totalorder %s19, 0
      %p103 = por %p101, %p102
      %p104 = scmp.ne.s32.totalorder %s92, %s93
      %p105 = scmp.eq.s32.totalorder %s20, 1
      %p106 = por %p104, %p105
      %p108 = scmp.ne.s32.totalorder %s93, %s107
      %p109 = scmp.eq.s32.totalorder %s20, 0
      %p110 = por %p108, %p109
      %s112 = sadd.s32 %s111, 1
      %p115 = scmp.eq.s32.totalorder %s14, 1
      %p116 = scmp.ne.s32.totalorder %s111, %s113
      %p117 = scmp.eq.s32.totalorder %s14, 0
      %p118 = por %p116, %p117
      %p119 = scmp.ne.s32.totalorder %s111, %s113
      %p120 = scmp.eq.s32.totalorder %s19, 1
      %p121 = por %p119, %p120
      %p122 = scmp.ne.s32.totalorder %s113, %s114
      %p123 = scmp.eq.s32.totalorder %s19, 0
      %p124 = por %p122, %p123
      %p125 = scmp.ne.s32.totalorder %s113, %s114
      %p126 = scmp.eq.s32.totalorder %s20, 1
      %p127 = por %p125, %p126
      %p129 = scmp.ne.s32.totalorder %s114, %s128
      %p130 = scmp.eq.s32.totalorder %s20, 0
      %p131 = por %p129, %p130
      %s132 = ssub.s32 %s14, %s21
      %p133 = scmp.eq.s32.totalorder %s132, 0
      %s135 = sadd.s32 %s134, 1
      %s136 = scalar_select %p133, %s134, %s135
      %p139 = pneg %p133
      %p140 = scmp.eq.s32.totalorder %s14, 1
      %p141 = por %p139, %p140
      %p142 = scmp.ne.s32.totalorder %s134, %s137
      %p143 = scmp.eq.s32.totalorder %s14, 0
      %p144 = por %p142, %p143
      %p145 = scmp.ne.s32.totalorder %s134, %s137
      %p146 = scmp.eq.s32.totalorder %s19, 1
      %p147 = por %p145, %p146
      %p148 = scmp.ne.s32.totalorder %s137, %s138
      %p149 = scmp.eq.s32.totalorder %s19, 0
      %p150 = por %p148, %p149
      %p151 = scmp.ne.s32.totalorder %s137, %s138
      %p152 = scmp.eq.s32.totalorder %s20, 1
      %p153 = por %p151, %p152
      %p155 = scmp.ne.s32.totalorder %s138, %s154
      %p156 = scmp.eq.s32.totalorder %s20, 0
      %p157 = por %p155, %p156
      %p158 = scmp.le.s32.totalorder 1, %s14
      %p159 = scmp.lt.s32.totalorder %s14, 3
      %p160 = pnand %p158, %p159
      %p161 = pneg %p160
      // Predicated region
      $region9: #{tpu_custom_call.1} parent=5 // pred_check
        _
      $region10: #{tpu_custom_call.1} parent=5 // pred_check_branch
        %163 = sbr.rel (%p160) target = $region12
      $region11: #{tpu_custom_call.1} parent=5 // pred_region
        %s164 = ssub.s32 %s14, 1
        // Predicated region
        $region13: #{tpu_custom_call.1} parent=11 // pred_check
          %p165 = pneg %p61
        $region14: #{tpu_custom_call.1} parent=11 // pred_check_branch
          %167 = sbr.rel (%p165) target = $region16
        $region15: #{tpu_custom_call.1} parent=11 // pred_region
          _
        $region16: #{tpu_custom_call.1} parent=11 // pred_fallthru
          _
        // Predicated region
        $region17: #{tpu_custom_call.1} parent=11 // pred_check
          %p168 = pneg %p82
        $region18: #{tpu_custom_call.1} parent=11 // pred_check_branch
          %170 = sbr.rel (%p168) target = $region20
        $region19: #{tpu_custom_call.1} parent=11 // pred_region
          _
        $region20: #{tpu_custom_call.1} parent=11 // pred_fallthru
          _
        // Predicated region
        $region21: #{tpu_custom_call.1} parent=11 // pred_check
          %p171 = pneg %p103
        $region22: #{tpu_custom_call.1} parent=11 // pred_check_branch
          %173 = sbr.rel (%p171) target = $region24
        $region23: #{tpu_custom_call.1} parent=11 // pred_region
          _
        $region24: #{tpu_custom_call.1} parent=11 // pred_fallthru
          _
        // Predicated region
        $region25: #{tpu_custom_call.1} parent=11 // pred_check
          %p174 = pneg %p124
        $region26: #{tpu_custom_call.1} parent=11 // pred_check_branch
          %176 = sbr.rel (%p174) target = $region28
        $region27: #{tpu_custom_call.1} parent=11 // pred_region
          _
        $region28: #{tpu_custom_call.1} parent=11 // pred_fallthru
          _
      $region12: #{tpu_custom_call.1} parent=5 // pred_fallthru
        _
      %p177 = scmp.lt.s32.totalorder %s14, 2
      // Predicated region
      $region29: #{tpu_custom_call.1} parent=5 // pred_check
        %p178 = pneg %p177
      $region30: #{tpu_custom_call.1} parent=5 // pred_check_branch
        %180 = sbr.rel (%p178) target = $region32
      $region31: #{tpu_custom_call.1} parent=5 // pred_region
        // Predicated region
        $region33: #{tpu_custom_call.1} parent=31 // pred_check
          %p181 = pneg %p34
        $region34: #{tpu_custom_call.1} parent=31 // pred_check_branch
          %183 = sbr.rel (%p181) target = $region36
        $region35: #{tpu_custom_call.1} parent=31 // pred_region
          %p184 = scmp.lt.s32.totalorder %s14, 1
          %s185 = scalar_select %p184, %s14, 1
          %s186 = smul.addr %s185, 2
          %s187 = smul.addr %s186, 4
          %s188 = scalar_lea.vmem %s0, %s187
        $region36: #{tpu_custom_call.1} parent=31 // pred_fallthru
          _
      $region32: #{tpu_custom_call.1} parent=5 // pred_fallthru
        _
      %p189 = scmp.le.s32.totalorder 1, %s14
      %p190 = scmp.lt.s32.totalorder %s14, 3
      %p191 = pnand %p189, %p190
      %p192 = pneg %p191
      // Predicated region
      $region37: #{tpu_custom_call.1} parent=5 // pred_check
        _
      $region38: #{tpu_custom_call.1} parent=5 // pred_check_branch
        %194 = sbr.rel (%p191) target = $region40
      $region39: #{tpu_custom_call.1} parent=5 // pred_region
        %s195 = ssub.s32 %s14, 1
        %p196 = scmp.lt.s32.totalorder %s19, 1
        %s197 = scalar_select %p196, %s19, 1
        %s198 = smul.addr %s197, 2
        %s199 = smul.addr %s198, 4
        %s200 = scalar_lea.vmem %s0, %s199
        %p201 = pneg %p40
        %p202 = pneg %p37
        %p203 = pneg %p61
        %p204 = pneg %p58
        %p205 = pneg %p82
        %p206 = pneg %p79
        %p207 = pneg %p103
        %p208 = pneg %p100
        %p209 = pneg %p124
        %p210 = pneg %p121
        %p211 = pneg %p150
        %p212 = pneg %p147
        %s213 = sand.u32 %s137, 1
        %s214 = scalar_lea.sflag [#allocation3], %s213
        %s215 = sand.u32 %s137, 1
        %s216 = smul.addr %s215, 8
        %s217 = scalar_lea.vmem [#allocation2], %s216
        %p218 = scmp.lt.s32.totalorder %s19, 1
        %s219 = scalar_select %p218, %s19, 1
        %s220 = smul.addr %s219, 2
        %s221 = smul.addr %s220, 4
        %s222 = scalar_lea.vmem %s0, %s221
        %v223 = vld [vmem:[%s222] sm:$0xff]
        %225 = vst [vmem:[#allocation1] ss:$2 sm:$0xff] %v223
        %v226 = vld.sshfl [vmem:[#allocation1] sm:$0xff pattern:$0x75316420]
        %v227 = vld.sshfl [vmem:[#allocation1 + $0x8] sm:$0xff pattern:$0x75316420]
        %vm230 = vcmask 1043456
        %v231 = vsel %vm230, %v226, 0.0
        %v232 = vsel %vm230, %v227, 0.0
        %v233 = vadd.f32 %v231, %v232
        %234 = vadd.xlane.f32.xlu0 %v233
        %v235 = vpop.xlane.xlu0 %234
        %v236 = vrcp.pop 256.0
        %v237 = vmul.f32 256.0, %v236
        %v238 = vsub.f32 1.0, %v237
        %v239 = vmul.f32 %v236, %v238
        %v240 = vadd.f32 %v236, %v239
        %vm241 = vweird.f32 %v236
        %v242 = vsel %vm241, %v236, %v240
        %v243 = vmul.f32 %v235, %v242
        %v244 = vld [vmem:[%s1] sm:$0xf]
        %v245 = vld [vmem:[%s2] sm:$0x1]
        %v247 = vlaneseq
        %v248 = vand.u32 %v247, 127
        %v249 = vperm.slane %v243, %v248
        %vm250 = vcmask 31744
        %v251 = vsel %vm250, %v249, 0
        %v254 = vsel %vm230, %v244, 0
        %256 = vmatpush.msra.mxu0 0.0
        %257 = vmatpush.msra.mxu0 0.0
        %258 = vmatpush.msra.mxu0 0.0
        %259 = vmatpush.msra.mxu0 0.0
        %260 = vmatpush.msra.mxu0 0.0
        %261 = vmatpush.msra.mxu0 0.0
        %262 = vmatpush.msra.mxu0 0.0
        %263 = vmatpush.msra.mxu0 0.0
        %264 = vmatpush.msra.mxu0 0.0
        %265 = vmatpush.msra.mxu0 0.0
        %266 = vmatpush.msra.mxu0 0.0
        %267 = vmatpush.msra.mxu0 0.0
        %268 = vmatpush.msra.mxu0 0.0
        %269 = vmatpush.msra.mxu0 0.0
        %270 = vmatpush.msra.mxu0 0.0
        %271 = vmatpush.msra.mxu0 %v254
        %272 = vmatmul.f32.gmra.mxu0 %v251
        %v273 = vpop.f32.mrf.mxu0
        %v274 = vadd.f32 %v245, %v273
        %275 = vdwg.mxu0
        %v276 = vmax.f32 %v274, 0.0
        %v277 = vld [vmem:[%s3] sm:$0xff]
        %v278 = vld [vmem:[%s3 + $0x8] sm:$0xff]
        %v279 = vld [vmem:[%s3 + $0x10] sm:$0xff]
        %v280 = vld [vmem:[%s3 + $0x18] sm:$0xff]
        %v281 = vld [vmem:[%s4] sm:$0x1]
        %vm282 = vcmask 261120
        %v284 = vsel %vm282, %v276, 0
        %286 = vmatpush.msra.mxu0 0.0
        %287 = vmatpush.msra.mxu0 0.0
        %288 = vmatpush.msra.mxu0 0.0
        %289 = vmatpush.msra.mxu0 0.0
        %290 = vmatpush.msra.mxu0 0.0
        %291 = vmatpush.msra.mxu0 0.0
        %292 = vmatpush.msra.mxu0 0.0
        %293 = vmatpush.msra.mxu0 0.0
        %294 = vmatpush.msra.mxu0 0.0
        %295 = vmatpush.msra.mxu0 0.0
        %296 = vmatpush.msra.mxu0 0.0
        %297 = vmatpush.msra.mxu0 0.0
        %298 = vmatpush.msra.mxu0 %v280
        %299 = vmatpush.msra.mxu0 %v279
        %300 = vmatpush.msra.mxu0 %v278
        %301 = vmatpush.msra.mxu0 %v277
        %302 = vmatmul.f32.gmra.mxu0 %v284
        %v303 = vpop.f32.mrf.mxu0
        %v304 = vadd.f32 %v281, %v303
        %305 = vdwg.mxu0
        %v306 = vperm.slane %v304, 0
        %v307 = vlaneseq
        %v308 = vshrl.u32 %v307, 7
        %310 = vset.pattern.permute.xlu0 %v308
        %311 = vperm.xlu0 %310, %v306
        %v312 = vpop.permute.xlu0 %311
        %v315 = vunpack.c.l.s4 839922192
        %v316 = vunpack.c.0.s8 %v315
        %v317 = vperm.slane %v312, %v316
        %v319 = vmul.f32 %v223, %v317
        %321 = vst [vmem:[#allocation1] ss:$2 sm:$0xff] %v319
        %v322 = vld.sshfl [vmem:[#allocation1] sm:$0xff pattern:$0x75316420]
        %v323 = vld.sshfl [vmem:[#allocation1 + $0x8] sm:$0xff pattern:$0x75316420]
        %v326 = vsel %vm230, %v322, 0.0
        %v327 = vrot.slane %v326, 4
        %v328 = vadd.f32 %v326, %v327
        %v329 = vrot.slane %v328, 2
        %v330 = vadd.f32 %v328, %v329
        %v331 = vrot.slane %v330, 1
        %v332 = vadd.f32 %v330, %v331
        %v333 = vsel %vm230, %v323, 0.0
        %v334 = vrot.slane %v333, 4
        %v335 = vadd.f32 %v333, %v334
        %v336 = vrot.slane %v335, 2
        %v337 = vadd.f32 %v335, %v336
        %v338 = vrot.slane %v337, 1
        %v339 = vadd.f32 %v337, %v338
        %v340 = vlaneseq
        %v341 = vshrl.u32 %v340, 7
        %v342 = vadd.s32 %v341, 4
        %343 = vset.pattern.permute.xlu0 %v342
        %344 = vperm.xlu0 %343, %v306
        %v345 = vpop.permute.xlu0 %344
        %v346 = vadd.f32 %v332, %v345
        %v347 = vadd.f32 %v339, %v345
        %v348 = vxor.u32 %v346, 2147483648
        %v349 = vxor.u32 %v347, 2147483648
        %v350 = vmul.f32 %v348, 1.442695
        %v351 = vpow.pop %v350
        %v352 = vmul.f32 %v349, 1.442695
        %v353 = vpow.pop %v352
        %v354 = vadd.f32 %v351, 1.0
        %v355 = vadd.f32 %v353, 1.0
        %v356 = vrcp.pop %v354
        %v357 = vmul.f32 %v354, %v356
        %v358 = vsub.f32 1.0, %v357
        %v359 = vmul.f32 %v356, %v358
        %v360 = vadd.f32 %v356, %v359
        %vm361 = vweird.f32 %v354
        %vm362 = vweird.f32 %v356
        %vm363 = vmor %vm361, %vm362
        %v364 = vsel %vm363, %v356, %v360
        %v365 = vand.u32 2147483647, %v354
        %vm366 = vcmp.eq.f32.partialorder %v365, 8.507059e+37
        %v367 = vand.u32 %v354, 2147483648
        %v368 = vor.u32 1.1754944e-38, %v367
        %v369 = vsel %vm366, %v368, %v364
        %v370 = vmul.f32 1.0, %v369
        %v371 = vrcp.pop %v355
        %v372 = vmul.f32 %v355, %v371
        %v373 = vsub.f32 1.0, %v372
        %v374 = vmul.f32 %v371, %v373
        %v375 = vadd.f32 %v371, %v374
        %vm376 = vweird.f32 %v355
        %vm377 = vweird.f32 %v371
        %vm378 = vmor %vm376, %vm377
        %v379 = vsel %vm378, %v371, %v375
        %v380 = vand.u32 2147483647, %v355
        %vm381 = vcmp.eq.f32.partialorder %v380, 8.507059e+37
        %v382 = vand.u32 %v355, 2147483648
        %v383 = vor.u32 1.1754944e-38, %v382
        %v384 = vsel %vm381, %v383, %v379
        %v385 = vmul.f32 1.0, %v384
        %v388 = vrot.slane %v385, 4
        %v389 = vsel %vm230, %v370, %v388
        %v391 = vmul.f32 %v223, %v389
        %392 = vst [vmem:[%s217] sm:$0xff] %v391
        %s393 = sand.u32 %s137, 1
        %s394 = scalar_lea.sflag [#allocation3], %s393
        %s395 = sand.u32 %s137, 1
        %s396 = smul.addr %s395, 8
        %s397 = scalar_lea.vmem [#allocation2], %s396
        // Predicated region
        $region41: #{tpu_custom_call.1} parent=39 // pred_check
          %p398 = pneg %p147
        $region42: #{tpu_custom_call.1} parent=39 // pred_check_branch
          %400 = sbr.rel (%p398) target = $region44
        $region43: #{tpu_custom_call.1} parent=39 // pred_region
          %402 = vsyncadd %s394, 0
          %s403 = smul.addr %s19, 2
          %s404 = smul.addr %s403, 4
          %s405 = scalar_lea.hbm %s5, %s404
          %s407 = sshll.u32 %s397, 4
          %s408 = int_to_ptr.vmem [resolvable:$true] %s407
          %s409 = sshll.u32 %s405, 4
          %s410 = int_to_ptr.hbm [resolvable:$true] %s409
          %412 = dma.vmem_to_hbm [thread:$0]  %s408, 128, %s410, %s394
        $region44: #{tpu_custom_call.1} parent=39 // pred_fallthru
          _
      $region40: #{tpu_custom_call.1} parent=5 // pred_fallthru
        _
      %p413 = scmp.le.s32.totalorder 2, %s14
      // Predicated region
      $region45: #{tpu_custom_call.1} parent=5 // pred_check
        %p414 = pneg %p413
      $region46: #{tpu_custom_call.1} parent=5 // pred_check_branch
        %416 = sbr.rel (%p414) target = $region48
      $region47: #{tpu_custom_call.1} parent=5 // pred_region
        %s417 = ssub.s32 %s14, 2
        // Predicated region
        $region49: #{tpu_custom_call.1} parent=47 // pred_check
          %p418 = pneg %p153
        $region50: #{tpu_custom_call.1} parent=47 // pred_check_branch
          %420 = sbr.rel (%p418) target = $region52
        $region51: #{tpu_custom_call.1} parent=47 // pred_region
          %s421 = sand.u32 %s138, 1
          %s422 = scalar_lea.sflag [#allocation3], %s421
          %s423 = sand.u32 %s138, 1
          %s424 = smul.addr %s423, 8
          %s425 = scalar_lea.vmem [#allocation2], %s424
          %427 = dma.done %s422, 128
        $region52: #{tpu_custom_call.1} parent=47 // pred_fallthru
          _
      $region48: #{tpu_custom_call.1} parent=5 // pred_fallthru
        _
    $region6: #{tpu_custom_call.1} parent=1 // loop_footer
      %s18 = sadd.s32 1, %s14
    $region7: #{tpu_custom_call.1} parent=1 // loop_footer_branch
      %13 = sbr.rel target = $region3
    $region8: #{tpu_custom_call.1} parent=1 // loop_exit
      _
    %428 = vsyncpa [#allocation3], 1
    %s429 = scalar_lea.sflag [#allocation3], 1
    %430 = vsyncpa %s429, 1

</llo_original>
